<compile_context>
chip_gen: v6e
topology: v6e:2x2x1
jax: 0.10.0
libtpu: 0.0.40
codegen_flags: <defaults>
</compile_context>

<pallas_src>
import functools

import jax
import jax.numpy as jnp
from jax.experimental import pallas as pl
from jax.experimental.pallas import tpu as pltpu


def _round_up(x, m):
    return (x + m - 1) // m * m


def _dice_sums_kernel(p_ref, t_ref, out_ref):
    """Accumulate per-row spatial sums of p*t, p*p, t*t across spatial tiles.

    p_ref, t_ref : (r_block, tile) tiles of the flattened (padded) inputs
    out_ref      : (r_block, 3) resident f32 accumulator
                   col 0 = sum(p*t), col 1 = sum(p*p), col 2 = sum(t*t)
    """
    # Output block is resident across the spatial (reduction) grid axis.
    @pl.when(pl.program_id(1) == 0)
    def _():
        out_ref[...] = jnp.zeros_like(out_ref)

    p = p_ref[...].astype(jnp.float32)
    t = t_ref[...].astype(jnp.float32)

    s_pt = jnp.sum(p * t, axis=1, keepdims=True)
    s_pp = jnp.sum(p * p, axis=1, keepdims=True)
    s_tt = jnp.sum(t * t, axis=1, keepdims=True)

    # Single packed read-modify-write instead of three (r, 1) accumulators.
    out_ref[...] += jnp.concatenate([s_pt, s_pp, s_tt], axis=1)


@functools.partial(jax.jit, static_argnames=("eps", "tile"))
def soft_dice_loss(y_preds, y_truths, eps=1e-8, tile=None):
    """Soft dice loss: 1 - mean_{b,c}( (2*sum(p*t) + eps) / (sum(p*p)+sum(t*t)+eps) )."""
    bs, num_classes, h, w = y_preds.shape
    assert y_truths.shape == y_preds.shape
    r = bs * num_classes
    hw = h * w

    # --- row blocking: <= ~256 rows per block, multiple of 8 sublanes --------
    n_row_blocks = -(-r // 256)
    r_block = _round_up(-(-r // n_row_blocks), 8)
    r_pad = r_block * n_row_blocks

    # --- lane tile: target ~2 MiB of f32 per input block ---------------------
    if tile is None:
        tile = max(128, (2 * 1024 * 1024 // 4) // r_block)
    tile = _round_up(max(128, min(tile, _round_up(hw, 128))), 128)
    hw_pad = _round_up(hw, tile)
    n_sp_tiles = hw_pad // tile

    # Flatten + pad (dtype preserved; bf16 stays bf16 in HBM).
    p2d = y_preds.reshape(r, hw)
    t2d = y_truths.reshape(r, hw)
    if (r_pad, hw_pad) != (r, hw):
        pad = ((0, r_pad - r), (0, hw_pad - hw))
        p2d = jnp.pad(p2d, pad)  # zero padding is exact for all three sums
        t2d = jnp.pad(t2d, pad)

    itemsize = jnp.dtype(y_preds.dtype).itemsize
    cost = pl.CostEstimate(
        flops=6 * r_pad * hw_pad,
        transcendentals=0,
        bytes_accessed=2 * r_pad * hw_pad * itemsize + r_pad * 3 * 4,
    )

    sums = pl.pallas_call(
        _dice_sums_kernel,
        out_shape=jax.ShapeDtypeStruct((r_pad, 3), jnp.float32),
        grid_spec=pltpu.PrefetchScalarGridSpec(
            num_scalar_prefetch=0,
            grid=(n_row_blocks, n_sp_tiles),
            in_specs=[
                pl.BlockSpec((r_block, tile), lambda i, j: (i, j)),
                pl.BlockSpec((r_block, tile), lambda i, j: (i, j)),
            ],
            out_specs=pl.BlockSpec((r_block, 3), lambda i, j: (i, 0)),
        ),
        compiler_params=pltpu.CompilerParams(
            # row axis sharded across TensorCores (helps v7x; harmless on 1-TC
            # chips); the spatial reduction axis stays serial ("arbitrary").
            dimension_semantics=("parallel", "arbitrary"),
            # Raise scoped VMEM above the v5e default (16 MiB) but stay below
            # v7x's 64 MiB physical VMEM.
            vmem_limit_bytes=48 * 1024 * 1024,
        ),
        cost_estimate=cost,
    )(p2d, t2d)

    inter = sums[:r, 0] + eps / 2.0
    union = sums[:r, 1] + sums[:r, 2] + eps
    dices = (2.0 * inter / union).reshape(bs, num_classes)

    # matches torch: mean over batch dim, then mean over classes
    dice = jnp.mean(jnp.mean(dices, axis=0))
    return (1.0 - dice).astype(jnp.float32)


def _reference_soft_dice_loss(y_preds, y_truths, eps=1e-8):
    """Pure-JAX reference mirroring the PyTorch forward exactly."""
    inter = jnp.sum(y_preds * y_truths, axis=(2, 3)) + eps / 2.0
    union = (
        jnp.sum(y_preds * y_preds, axis=(2, 3))
        + jnp.sum(y_truths * y_truths, axis=(2, 3))
        + eps
    )
    dices_bs = 2.0 * inter / union
    return 1.0 - jnp.mean(jnp.mean(dices_bs, axis=0))


if __name__ == "__main__":
    key = jax.random.PRNGKey(0)
    k1, k2, k3, k4 = jax.random.split(key, 4)

    # Primary small case (NCHW, matching the module's expected layout).
    bs, num_classes, h, w = 2, 4, 16, 16
    y_preds = jax.random.uniform(k1, (bs, num_classes, h, w), dtype=jnp.float32)
    labels = jax.random.randint(k2, (bs, h, w), 0, num_classes)
    y_truths = jnp.transpose(
        jax.nn.one_hot(labels, num_classes, dtype=jnp.float32), (0, 3, 1, 2)
    )  # NHWC -> NCHW

    loss = jax.block_until_ready(soft_dice_loss(y_preds, y_truths))
    ref = _reference_soft_dice_loss(y_preds, y_truths)
    assert jnp.allclose(loss, ref, atol=1e-5, rtol=1e-5), (loss, ref)

    # Odd spatial / channel sizes exercise the zero-padding path.
    bs2, c2, h2, w2 = 2, 3, 15, 17
    yp2 = jax.random.uniform(k3, (bs2, c2, h2, w2), dtype=jnp.float32)
    yt2 = jax.random.uniform(k4, (bs2, c2, h2, w2), dtype=jnp.float32)
    loss2 = jax.block_until_ready(soft_dice_loss(yp2, yt2))
    ref2 = _reference_soft_dice_loss(yp2, yt2)
    assert jnp.allclose(loss2, ref2, atol=1e-5, rtol=1e-5), (loss2, ref2)

    print("KERNEL_OK")
</pallas_src>

<mosaic_0001>
module attributes {stable_mosaic.version = 11 : i64} {
  func.func @_dice_sums_kernel(%arg0: i32, %arg1: i32, %arg2: memref<8x256xf32, #tpu.memory_space<vmem>>, %arg3: memref<8x256xf32, #tpu.memory_space<vmem>>, %arg4: memref<8x3xf32, #tpu.memory_space<vmem>>) attributes {dimension_semantics = [#tpu.dimension_semantics<parallel>, #tpu.dimension_semantics<arbitrary>], iteration_bounds = array<i64: 1, 1>, scalar_prefetch = 0 : i64, scratch_operands = 0 : i64, tpu.core_type = #tpu.core_type<tc>, window_params = [{transform_indices = @transform_0, window_bounds = array<i64: 8, 256>}, {transform_indices = @transform_1, window_bounds = array<i64: 8, 256>}, {transform_indices = @transform_2, window_bounds = array<i64: 8, 3>}]} {
    %c0_i32 = arith.constant 0 : i32
    %0 = arith.cmpi eq, %arg1, %c0_i32 : i32
    %1 = arith.extui %0 : i1 to i32
    %c0_i32_0 = arith.constant 0 : i32
    %2 = arith.cmpi ne, %1, %c0_i32_0 : i32
    scf.if %2 {
      %cst_10 = arith.constant 0.000000e+00 : f32
      %18 = vector.broadcast %cst_10 : f32 to vector<8x3xf32>
      %c0_11 = arith.constant 0 : index
      %c0_12 = arith.constant 0 : index
      %19 = vector.load %arg4[%c0_11, %c0_12] : memref<8x3xf32, #tpu.memory_space<vmem>>, vector<8x3xf32>
      tpu.vector_store %arg4[%c0_11, %c0_12], %18 {strides = array<i32>} : memref<8x3xf32, #tpu.memory_space<vmem>>, vector<8x3xf32>,
    } else {
    }
    %c0 = arith.constant 0 : index
    %c0_1 = arith.constant 0 : index
    %3 = vector.load %arg2[%c0, %c0_1] : memref<8x256xf32, #tpu.memory_space<vmem>>, vector<8x256xf32>
    %c0_2 = arith.constant 0 : index
    %c0_3 = arith.constant 0 : index
    %4 = vector.load %arg3[%c0_2, %c0_3] : memref<8x256xf32, #tpu.memory_space<vmem>>, vector<8x256xf32>
    %5 = arith.mulf %3, %4 : vector<8x256xf32>
    %cst = arith.constant dense<0.000000e+00> : vector<8xf32>
    %6 = vector.multi_reduction <add>, %5, %cst [1] : vector<8x256xf32> to vector<8xf32>
    %7 = vector.shape_cast %6 : vector<8xf32> to vector<8x1xf32>
    %8 = arith.mulf %3, %3 : vector<8x256xf32>
    %cst_4 = arith.constant dense<0.000000e+00> : vector<8xf32>
    %9 = vector.multi_reduction <add>, %8, %cst_4 [1] : vector<8x256xf32> to vector<8xf32>
    %10 = vector.shape_cast %9 : vector<8xf32> to vector<8x1xf32>
    %11 = arith.mulf %4, %4 : vector<8x256xf32>
    %cst_5 = arith.constant dense<0.000000e+00> : vector<8xf32>
    %12 = vector.multi_reduction <add>, %11, %cst_5 [1] : vector<8x256xf32> to vector<8xf32>
    %13 = vector.shape_cast %12 : vector<8xf32> to vector<8x1xf32>
    %c0_6 = arith.constant 0 : index
    %c0_7 = arith.constant 0 : index
    %14 = vector.load %arg4[%c0_6, %c0_7] : memref<8x3xf32, #tpu.memory_space<vmem>>, vector<8x3xf32>
    %15 = tpu.concatenate %7, %10, %13 in 1 : vector<8x1xf32>, vector<8x1xf32>, vector<8x1xf32> -> vector<8x3xf32>
    %16 = arith.addf %14, %15 : vector<8x3xf32>
    %c0_8 = arith.constant 0 : index
    %c0_9 = arith.constant 0 : index
    %17 = vector.load %arg4[%c0_8, %c0_9] : memref<8x3xf32, #tpu.memory_space<vmem>>, vector<8x3xf32>
    tpu.vector_store %arg4[%c0_8, %c0_9], %16 {strides = array<i32>} : memref<8x3xf32, #tpu.memory_space<vmem>>, vector<8x3xf32>,
    return
  }
  func.func @transform_0(%arg0: i32, %arg1: i32) -> (i32, i32) {
    %c0_i32 = arith.constant 0 : i32
    return %arg0, %arg1 : i32, i32
  }
  func.func @transform_1(%arg0: i32, %arg1: i32) -> (i32, i32) {
    %c0_i32 = arith.constant 0 : i32
    return %arg0, %arg1 : i32, i32
  }
  func.func @transform_2(%arg0: i32, %arg1: i32) -> (i32, i32) {
    %c0_i32 = arith.constant 0 : i32
    %c0_i32_0 = arith.constant 0 : i32
    return %arg0, %c0_i32 : i32, i32
  }
}

</mosaic_0001>

<llo_original>
// kernel: soft_dice_loss.1
$region0: #{soft_dice_loss.1}
  #allocation0 [shape = 'u32[]', space=smem, size = 0x4, offset = 0x4, fixed_abs, tag = 'smem constant byte address 0x4 - core index']
  #allocation1 [shape = 'u32[144,128]{1,0:T(1,128)}', space=vmem, size = 0x12000, scoped, tag = 'internal scratch']
  %s0 = inlined_call_operand.vmem [shape: f32[8,256], index: 0, kind: input, shape index: {}]
  %s1 = inlined_call_operand.vmem [shape: f32[8,256], index: 1, kind: input, shape index: {}]
  %s2 = inlined_call_operand.vmem [shape: f32[8,3], index: 2, kind: output, shape index: {}]
  %s3 = sld [smem:[#allocation0]]
  $region22: #{soft_dice_loss.1} parent=0
    _
  %s5 = ssub.s32 1, %s3
  %s6 = scalar_select 0, %s5, %s3
  // Predicated region
  $region2: #{soft_dice_loss.1} parent=0 // pred_check
    _
  $region3: #{soft_dice_loss.1} parent=0 // pred_check_branch
    %8 = sbr.rel (0) target = $region5
  $region4: #{soft_dice_loss.1} parent=0 // pred_region
    _
  $region5: #{soft_dice_loss.1} parent=0 // pred_fallthru
    _
  // Predicated region
  $region6: #{soft_dice_loss.1} parent=0 // pred_check
    _
  $region7: #{soft_dice_loss.1} parent=0 // pred_check_branch
    %10 = sbr.rel (0) target = $region9
  $region8: #{soft_dice_loss.1} parent=0 // pred_region
    _
  $region9: #{soft_dice_loss.1} parent=0 // pred_fallthru
    _
  %p11 = scmp.eq.s32.totalorder 0, 0
  // Predicated region
  $region10: #{soft_dice_loss.1} parent=0 // pred_check
    %p12 = pneg %p11
  $region11: #{soft_dice_loss.1} parent=0 // pred_check_branch
    %14 = sbr.rel (%p12) target = $region13
  $region12: #{soft_dice_loss.1} parent=0 // pred_region
    %vm15 = vcmask 23552
    %16 = vst.msk [vmem:[%s2] sm:$0xff] %vm15, 0.0
  $region13: #{soft_dice_loss.1} parent=0 // pred_fallthru
    _
  %v17 = vld [vmem:[%s0] sm:$0xff]
  %v18 = vld [vmem:[%s0 + $0x8] sm:$0xff]
  %v19 = vld [vmem:[%s1] sm:$0xff]
  %v20 = vld [vmem:[%s1 + $0x8] sm:$0xff]
  %v21 = vmul.f32 %v17, %v19
  %v22 = vmul.f32 %v18, %v20
  %v23 = vadd.f32 %v21, %v22
  %24 = vadd.xlane.f32.xlu0 %v23
  %v25 = vpop.xlane.xlu0 %24
  %v26 = vmul.f32 %v17, %v17
  %v27 = vmul.f32 %v18, %v18
  %v28 = vadd.f32 %v26, %v27
  %29 = vadd.xlane.f32.xlu0 %v28
  %v30 = vpop.xlane.xlu0 %29
  %v31 = vmul.f32 %v19, %v19
  %v32 = vmul.f32 %v20, %v20
  %v33 = vadd.f32 %v31, %v32
  %34 = vadd.xlane.f32.xlu0 %v33
  %v35 = vpop.xlane.xlu0 %34
  %v36 = vld [vmem:[%s2] sm:$0xff]
  %vm37 = vcmask 7168
  %v38 = vsel %vm37, %v25, %v30
  %vm39 = vcmask 15360
  %v40 = vsel %vm39, %v38, %v35
  %v41 = vadd.f32 %v36, %v40
  %vm42 = vcmask 23552
  %43 = vst.msk [vmem:[%s2] sm:$0xff] %vm42, %v41
  // Predicated region
  $region14: #{soft_dice_loss.1} parent=0 // pred_check
    _
  $region15: #{soft_dice_loss.1} parent=0 // pred_check_branch
    %45 = sbr.rel (0) target = $region17
  $region16: #{soft_dice_loss.1} parent=0 // pred_region
    _
  $region17: #{soft_dice_loss.1} parent=0 // pred_fallthru
    _
  // Predicated region
  $region18: #{soft_dice_loss.1} parent=0 // pred_check
    _
  $region19: #{soft_dice_loss.1} parent=0 // pred_check_branch
    %47 = sbr.rel (0) target = $region21
  $region20: #{soft_dice_loss.1} parent=0 // pred_region
    _
  $region21: #{soft_dice_loss.1} parent=0 // pred_fallthru
    _

</llo_original>
